<compile_context>
chip_gen: v5e
topology: v5e:2x2
jax: 0.10.0
libtpu: 0.0.40
codegen_flags: <defaults>
</compile_context>

<pallas_src>
import jax
import jax.numpy as jnp
from jax.experimental import pallas as pl
from jax.experimental.pallas import tpu as pltpu

VAL_ROWS = 8
VAL_COLS = 128


def _always_kernel(val_ref, out_ref):
    # Output HBM buffer aliases the input (`input_output_aliases={0: 0}`); the
    # copy keeps the body trivially correct whether or not the writeback DMA
    # is elided by the compiler.
    out_ref[...] = val_ref[...]


def _make_always_pallas_call(val: jax.Array):
    rows, cols = val.shape
    # Lane-dense layout: keeps the store path on unmasked `vst` (odd cols, e.g.
    # 64, would silently fall back to masked vst.msk partial stores).
    assert rows % 8 == 0 and cols % 128 == 0, (
        "val should be (8k, 128m) for a lane-dense, unmasked store path")

    return pl.pallas_call(
        _always_kernel,
        out_shape=jax.ShapeDtypeStruct((rows, cols), val.dtype),
        # Gridless whole-array VMEM specs: lowest possible Mosaic overhead.
        in_specs=[pl.BlockSpec(memory_space=pltpu.MemorySpace.VMEM)],
        out_specs=pl.BlockSpec(memory_space=pltpu.MemorySpace.VMEM),
        # Alias output <- input: no separate output HBM allocation / traffic.
        input_output_aliases={0: 0},
    )


def make_always(val, *, use_kernel: bool = False):
    """Returns a callable mimicking Always(val).forward: ignores every
    argument and returns `val`.

    Default (use_kernel=False): zero-overhead — just returns the stored array,
    exactly matching the PyTorch module (no copy, no kernel launch).

    use_kernel=True keeps a minimal gridless pallas_call boundary (whole-array
    VMEM BlockSpecs, output aliased to the input) for testing / fusion.
    """
    val = jnp.asarray(val)
    call = _make_always_pallas_call(val) if use_kernel else None

    def forward(*args, **kwargs):
        # Always.forward ignores every argument and returns self.val.
        del args, kwargs
        if call is None:
            return val
        return call(val)

    return forward


if __name__ == "__main__":
    key = jax.random.PRNGKey(0)
    k_val, k_x = jax.random.split(key)

    # Deterministic "parameter": the constant value held by the module.
    val = jax.random.normal(k_val, (VAL_ROWS, VAL_COLS), dtype=jnp.float32)

    # Example call argument (NCHW, as a performer call site would pass) — ignored.
    x = jax.random.normal(k_x, (2, 4, 16, 16), dtype=jnp.float32)

    # Optimized default path: no kernel launch at all.
    always = make_always(val)
    out_fast = jax.block_until_ready(always(x, some_kwarg=123))
    assert out_fast.shape == val.shape and out_fast.dtype == val.dtype
    assert bool(jnp.all(out_fast == val))

    # Minimal Pallas path: run the kernel once and verify exact reproduction.
    always_kernel = make_always(val, use_kernel=True)
    out_kernel = jax.block_until_ready(always_kernel(x, some_kwarg=123))
    assert out_kernel.shape == val.shape and out_kernel.dtype == val.dtype
    assert bool(jnp.all(out_kernel == val))

    print("KERNEL_OK")
</pallas_src>

<mosaic_0001>
module attributes {stable_mosaic.version = 11 : i64} {
  func.func @_always_kernel(%arg0: memref<8x128xf32, #tpu.memory_space<vmem>>, %arg1: memref<8x128xf32, #tpu.memory_space<vmem>>) attributes {dimension_semantics = [], scalar_prefetch = 0 : i64, scratch_operands = 0 : i64, tpu.core_type = #tpu.core_type<tc>} {
    %c0 = arith.constant 0 : index
    %c0_0 = arith.constant 0 : index
    %0 = vector.load %arg0[%c0, %c0_0] : memref<8x128xf32, #tpu.memory_space<vmem>>, vector<8x128xf32>
    %c0_1 = arith.constant 0 : index
    %c0_2 = arith.constant 0 : index
    %1 = vector.load %arg1[%c0_1, %c0_2] : memref<8x128xf32, #tpu.memory_space<vmem>>, vector<8x128xf32>
    tpu.vector_store %arg1[%c0_1, %c0_2], %0 {strides = array<i32>} : memref<8x128xf32, #tpu.memory_space<vmem>>, vector<8x128xf32>,
    return
  }
}

</mosaic_0001>

<llo_original>
// kernel: tpu_custom_call.1
$region0: #{tpu_custom_call.1}
  #allocation0 [shape = 'u32[]', space=smem, size = 0x4, offset = 0x4, fixed_abs, tag = 'smem constant byte address 0x4 - core index']
  #allocation1 [shape = 'u32[72,128]{1,0:T(1,128)}', space=vmem, size = 0x9000, scoped, tag = 'internal scratch']
  %s0 = inlined_call_operand.hbm [shape: f32[8,128], index: 0, kind: input, shape index: {}, may-alias: {0,1}]
  %s1 = inlined_call_operand.hbm [shape: f32[8,128], index: 1, kind: output, shape index: {}, may-alias: {0,1}]
  %s2 = sld [smem:[#allocation0]]
  $region18: #{tpu_custom_call.1} parent=0
    _
  %s4 = ssub.s32 1, %s2
  %s5 = scalar_select 0, %s4, %s2
  $region1: #{tpu_custom_call.1} parent=0
    #allocation2 [shape = 'u8[4096]{0}', space=vmem, size = 0x1000, scoped, tag = 'input window, operand 0, single buffered']
    #allocation3 [shape = 's32[1]{0}', space=sflag, size = 0x4, scoped, tag = 'scoped memory for tpu_custom_call.1']
    #allocation4 [shape = 's32[1]{0}', space=sflag, size = 0x4, scoped, tag = 'scoped memory for tpu_custom_call.1']
    #allocation5 [shape = 'u8[4096]{0}', space=vmem, size = 0x1000, scoped, tag = 'output window, operand 0, single buffered']
    %6 = vsyncpa [#allocation3], 0
    %7 = vsyncpa [#allocation4], 0
    // Predicated region
    $region2: #{tpu_custom_call.1} parent=1 // pred_check
      _
    $region3: #{tpu_custom_call.1} parent=1 // pred_check_branch
      %9 = sbr.rel (0) target = $region5
    $region4: #{tpu_custom_call.1} parent=1 // pred_region
      %11 = vsyncadd [#allocation3], 0
      %s13 = sshll.u32 %s0, 4
      %s14 = int_to_ptr.hbm [resolvable:$true] %s13
      %s15 = sshll.u32 [#allocation2], 4
      %s16 = int_to_ptr.vmem [resolvable:$true] %s15
      %18 = dma.hbm_to_vmem [thread:$0]  %s14, 128, %s16, [#allocation3]
    $region5: #{tpu_custom_call.1} parent=1 // pred_fallthru
      _
    // Predicated region
    $region6: #{tpu_custom_call.1} parent=1 // pred_check
      _
    $region7: #{tpu_custom_call.1} parent=1 // pred_check_branch
      %20 = sbr.rel (0) target = $region9
    $region8: #{tpu_custom_call.1} parent=1 // pred_region
      %22 = dma.done [#allocation3], 128
    $region9: #{tpu_custom_call.1} parent=1 // pred_fallthru
      _
    %v23 = vld [vmem:[#allocation2] sm:$0xff]
    %24 = vst [vmem:[#allocation5] sm:$0xff] %v23
    // Predicated region
    $region10: #{tpu_custom_call.1} parent=1 // pred_check
      _
    $region11: #{tpu_custom_call.1} parent=1 // pred_check_branch
      %26 = sbr.rel (0) target = $region13
    $region12: #{tpu_custom_call.1} parent=1 // pred_region
      %28 = vsyncadd [#allocation4], 0
      %s30 = sshll.u32 [#allocation5], 4
      %s31 = int_to_ptr.vmem [resolvable:$true] %s30
      %s32 = sshll.u32 %s1, 4
      %s33 = int_to_ptr.hbm [resolvable:$true] %s32
      %35 = dma.vmem_to_hbm [thread:$0]  %s31, 128, %s33, [#allocation4]
    $region13: #{tpu_custom_call.1} parent=1 // pred_fallthru
      _
    // Predicated region
    $region14: #{tpu_custom_call.1} parent=1 // pred_check
      _
    $region15: #{tpu_custom_call.1} parent=1 // pred_check_branch
      %37 = sbr.rel (0) target = $region17
    $region16: #{tpu_custom_call.1} parent=1 // pred_region
      %39 = dma.done [#allocation4], 128
    $region17: #{tpu_custom_call.1} parent=1 // pred_fallthru
      _
    %40 = vsyncpa [#allocation3], 1
    %41 = vsyncpa [#allocation4], 1

</llo_original>
